<compile_context>
chip_gen: v7x
topology: tpu7x:2x2x1
jax: 0.10.0
libtpu: 0.0.40
codegen_flags: <defaults>
</compile_context>

<pallas_src>
import numpy as np
import jax
import jax.numpy as jnp
from jax.experimental import pallas as pl
from jax.experimental.pallas import tpu as pltpu


def _band_ranges(sample_rate, bands, num_freqs):
    """Static (lo, hi) frequency-index range per band (exactly mirrors torch)."""
    frequencies = np.linspace(0, sample_rate / 2, num_freqs)
    ranges = []
    for f_low, f_high in bands:
        mask = (frequencies >= f_low) & (frequencies < f_high)
        idx = np.nonzero(mask)[0]
        if idx.size == 0:
            ranges.append((0, 0))
        else:
            lo, hi = int(idx[0]), int(idx[-1]) + 1
            # contiguity guaranteed by monotone linspace
            assert bool(np.all(mask[lo:hi]))
            ranges.append((lo, hi))
    return ranges


def _make_kernel(band_ranges):
    def kernel(x_ref, o_ref):
        x = x_ref[...]                                  # (BLK, F_read, T)
        blk, _, t = x.shape
        valid = jnp.logical_not(jnp.isnan(x))
        x_clean = jnp.where(valid, x.astype(jnp.float32), 0.0)
        cnt = valid.astype(jnp.float32)

        for bi, (lo, hi) in enumerate(band_ranges):     # static unroll (few bands)
            if hi > lo:
                s = jnp.sum(x_clean[:, lo:hi, :], axis=1, keepdims=True)
                c = jnp.sum(cnt[:, lo:hi, :], axis=1, keepdims=True)
                o_ref[:, bi:bi + 1, :] = (s / c).astype(o_ref.dtype)  # 0/0 -> NaN
            else:
                o_ref[:, bi:bi + 1, :] = jnp.full((blk, 1, t), jnp.nan, o_ref.dtype)

    return kernel


def aggregate_frequencies(x, sample_rate, bands):
    """Pallas implementation of AggregateFrequencies.forward."""
    *lead, F, T = x.shape
    nb = len(bands)
    ranges = _band_ranges(sample_rate, bands, F)

    lead_size = int(np.prod(lead)) if lead else 1
    x_flat = x.reshape(lead_size, F, T)

    # Union of band rows is a prefix [0, f_hi); DMA only that prefix (rounded
    # up to the dtype's sublane multiple so the block shape is legal).
    f_hi = max((hi for (_lo, hi) in ranges), default=0)
    if f_hi == 0:
        # All bands empty -> nanmean over empty slice -> NaN everywhere.
        out = jnp.full((lead_size, nb, T), jnp.nan, dtype=x.dtype)
        return out.reshape(*lead, nb, T)

    sub = {4: 8, 2: 16, 1: 32}.get(x.dtype.itemsize, 8)
    f_read = F if f_hi >= F else min(F, ((f_hi + sub - 1) // sub) * sub)

    # Tile sizing: keep (input + output) tile at a few MiB; double-buffered by
    # the pipeline this stays far below even v7x's 32 MiB scoped VMEM default.
    tile_budget = 4 * 1024 * 1024
    bytes_per_lead = (f_read * T + nb * T) * x.dtype.itemsize
    blk = max(1, min(lead_size, tile_budget // max(1, bytes_per_lead)))
    # Prefer >= 2 grid steps when possible so v7x can split across both TCs.
    if blk >= lead_size and lead_size >= 2:
        blk = pl.cdiv(lead_size, 2)
    grid = (pl.cdiv(lead_size, blk),)

    out = pl.pallas_call(
        _make_kernel(ranges),
        out_shape=jax.ShapeDtypeStruct((lead_size, nb, T), x.dtype),
        grid_spec=pltpu.PrefetchScalarGridSpec(
            num_scalar_prefetch=0,
            grid=grid,
            in_specs=[pl.BlockSpec((blk, f_read, T), lambda b: (b, 0, 0))],
            out_specs=pl.BlockSpec((blk, nb, T), lambda b: (b, 0, 0)),
        ),
        compiler_params=pltpu.CompilerParams(
            dimension_semantics=("parallel",),
        ),
    )(x_flat)

    return out.reshape(*lead, nb, T)


if __name__ == "__main__":
    # Module config (deterministic, in-script).
    sample_rate = 16000.0
    bands = [(0.0, 2000.0), (2000.0, 4000.0), (4000.0, 8000.0)]

    # Small input consistent with forward: (batch, channels, freqs, timesteps).
    B, C, F, T = 2, 4, 16, 128
    k1, k2 = jax.random.split(jax.random.PRNGKey(0))
    x = jax.random.normal(k1, (B, C, F, T), dtype=jnp.float32)
    # Sprinkle NaNs so nanmean semantics are actually exercised.
    nan_mask = jax.random.bernoulli(k2, 0.05, (B, C, F, T))
    x = jnp.where(nan_mask, jnp.nan, x)

    y = aggregate_frequencies(x, sample_rate, bands)
    y = jax.block_until_ready(y)

    # Reference: plain JAX with the same mask / nanmean / cat semantics as torch.
    frequencies = np.linspace(0, sample_rate / 2, F)
    refs = []
    for f_low, f_high in bands:
        m = (frequencies >= f_low) & (frequencies < f_high)
        idx = np.nonzero(m)[0]
        refs.append(jnp.nanmean(x[..., idx, :], axis=-2, keepdims=True))
    y_ref = jnp.concatenate(refs, axis=-2)

    assert y.shape == (B, C, len(bands), T), y.shape
    np.testing.assert_allclose(np.asarray(y), np.asarray(y_ref),
                               rtol=1e-6, atol=1e-6, equal_nan=True)

    print("KERNEL_OK")
</pallas_src>

<mosaic_0001>
module attributes {stable_mosaic.version = 11 : i64} {
  func.func @kernel(%arg0: i32, %arg1: memref<4x16x128xf32, #tpu.memory_space<vmem>>, %arg2: memref<4x3x128xf32, #tpu.memory_space<vmem>>) attributes {dimension_semantics = [#tpu.dimension_semantics<parallel>], iteration_bounds = array<i64: 2>, scalar_prefetch = 0 : i64, scratch_operands = 0 : i64, tpu.core_type = #tpu.core_type<tc>, window_params = [{transform_indices = @transform_0, window_bounds = array<i64: 4, 16, 128>}, {transform_indices = @transform_1, window_bounds = array<i64: 4, 3, 128>}]} {
    %c0 = arith.constant 0 : index
    %c0_0 = arith.constant 0 : index
    %c0_1 = arith.constant 0 : index
    %0 = vector.load %arg1[%c0, %c0_0, %c0_1] : memref<4x16x128xf32, #tpu.memory_space<vmem>>, vector<4x16x128xf32>
    %1 = arith.cmpf one, %0, %0 : vector<4x16x128xf32>
    %cst = arith.constant dense<true> : vector<4x16x128xi1>
    %2 = arith.xori %1, %cst : vector<4x16x128xi1>
    %cst_2 = arith.constant 0.000000e+00 : f32
    %3 = vector.broadcast %cst_2 : f32 to vector<4x16x128xf32>
    %4 = arith.select %2, %0, %3 : vector<4x16x128xi1>, vector<4x16x128xf32>
    %5 = arith.extui %2 : vector<4x16x128xi1> to vector<4x16x128xi32>
    %6 = arith.sitofp %5 : vector<4x16x128xi32> to vector<4x16x128xf32>
    %7 = vector.extract_strided_slice %4 {offsets = [0, 0, 0], sizes = [4, 4, 128], strides = [1, 1, 1]} : vector<4x16x128xf32> to vector<4x4x128xf32>
    %cst_3 = arith.constant dense<0.000000e+00> : vector<4x128xf32>
    %8 = vector.multi_reduction <add>, %7, %cst_3 [1] : vector<4x4x128xf32> to vector<4x128xf32>
    %9 = vector.shape_cast %8 : vector<4x128xf32> to vector<4x1x128xf32>
    %10 = vector.extract_strided_slice %6 {offsets = [0, 0, 0], sizes = [4, 4, 128], strides = [1, 1, 1]} : vector<4x16x128xf32> to vector<4x4x128xf32>
    %cst_4 = arith.constant dense<0.000000e+00> : vector<4x128xf32>
    %11 = vector.multi_reduction <add>, %10, %cst_4 [1] : vector<4x4x128xf32> to vector<4x128xf32>
    %12 = vector.shape_cast %11 : vector<4x128xf32> to vector<4x1x128xf32>
    %13 = arith.divf %9, %12 : vector<4x1x128xf32>
    %c0_5 = arith.constant 0 : index
    %c0_6 = arith.constant 0 : index
    %c0_7 = arith.constant 0 : index
    %14 = vector.load %arg2[%c0_5, %c0_6, %c0_7] : memref<4x3x128xf32, #tpu.memory_space<vmem>>, vector<4x1x128xf32>
    tpu.vector_store %arg2[%c0_5, %c0_6, %c0_7], %13 {strides = array<i32>} : memref<4x3x128xf32, #tpu.memory_space<vmem>>, vector<4x1x128xf32>,
    %15 = vector.extract_strided_slice %4 {offsets = [0, 4, 0], sizes = [4, 4, 128], strides = [1, 1, 1]} : vector<4x16x128xf32> to vector<4x4x128xf32>
    %cst_8 = arith.constant dense<0.000000e+00> : vector<4x128xf32>
    %16 = vector.multi_reduction <add>, %15, %cst_8 [1] : vector<4x4x128xf32> to vector<4x128xf32>
    %17 = vector.shape_cast %16 : vector<4x128xf32> to vector<4x1x128xf32>
    %18 = vector.extract_strided_slice %6 {offsets = [0, 4, 0], sizes = [4, 4, 128], strides = [1, 1, 1]} : vector<4x16x128xf32> to vector<4x4x128xf32>
    %cst_9 = arith.constant dense<0.000000e+00> : vector<4x128xf32>
    %19 = vector.multi_reduction <add>, %18, %cst_9 [1] : vector<4x4x128xf32> to vector<4x128xf32>
    %20 = vector.shape_cast %19 : vector<4x128xf32> to vector<4x1x128xf32>
    %21 = arith.divf %17, %20 : vector<4x1x128xf32>
    %c0_10 = arith.constant 0 : index
    %c1 = arith.constant 1 : index
    %c0_11 = arith.constant 0 : index
    %22 = vector.load %arg2[%c0_10, %c1, %c0_11] : memref<4x3x128xf32, #tpu.memory_space<vmem>>, vector<4x1x128xf32>
    tpu.vector_store %arg2[%c0_10, %c1, %c0_11], %21 {strides = array<i32>} : memref<4x3x128xf32, #tpu.memory_space<vmem>>, vector<4x1x128xf32>,
    %23 = vector.extract_strided_slice %4 {offsets = [0, 8, 0], sizes = [4, 7, 128], strides = [1, 1, 1]} : vector<4x16x128xf32> to vector<4x7x128xf32>
    %cst_12 = arith.constant dense<0.000000e+00> : vector<4x128xf32>
    %24 = vector.multi_reduction <add>, %23, %cst_12 [1] : vector<4x7x128xf32> to vector<4x128xf32>
    %25 = vector.shape_cast %24 : vector<4x128xf32> to vector<4x1x128xf32>
    %26 = vector.extract_strided_slice %6 {offsets = [0, 8, 0], sizes = [4, 7, 128], strides = [1, 1, 1]} : vector<4x16x128xf32> to vector<4x7x128xf32>
    %cst_13 = arith.constant dense<0.000000e+00> : vector<4x128xf32>
    %27 = vector.multi_reduction <add>, %26, %cst_13 [1] : vector<4x7x128xf32> to vector<4x128xf32>
    %28 = vector.shape_cast %27 : vector<4x128xf32> to vector<4x1x128xf32>
    %29 = arith.divf %25, %28 : vector<4x1x128xf32>
    %c0_14 = arith.constant 0 : index
    %c2 = arith.constant 2 : index
    %c0_15 = arith.constant 0 : index
    %30 = vector.load %arg2[%c0_14, %c2, %c0_15] : memref<4x3x128xf32, #tpu.memory_space<vmem>>, vector<4x1x128xf32>
    tpu.vector_store %arg2[%c0_14, %c2, %c0_15], %29 {strides = array<i32>} : memref<4x3x128xf32, #tpu.memory_space<vmem>>, vector<4x1x128xf32>,
    return
  }
  func.func @transform_0(%arg0: i32) -> (i32, i32, i32) {
    %c0_i32 = arith.constant 0 : i32
    %c0_i32_0 = arith.constant 0 : i32
    %c0_i32_1 = arith.constant 0 : i32
    return %arg0, %c0_i32, %c0_i32_0 : i32, i32, i32
  }
  func.func @transform_1(%arg0: i32) -> (i32, i32, i32) {
    %c0_i32 = arith.constant 0 : i32
    %c0_i32_0 = arith.constant 0 : i32
    %c0_i32_1 = arith.constant 0 : i32
    return %arg0, %c0_i32, %c0_i32_0 : i32, i32, i32
  }
}

</mosaic_0001>

<llo_original>
// kernel: tpu_custom_call.1
$region0: #{tpu_custom_call.1}
  #allocation0 [shape = 'u32[]', space=smem, size = 0x4, offset = 0x4, fixed_abs, tag = 'smem constant byte address 0x4 - core index']
  #allocation1 [shape = 'u32[144,128]{1,0:T(1,128)}', space=vmem, size = 0x12000, scoped, tag = 'internal scratch']
  %s0 = inlined_call_operand.hbm [shape: f32[8,16,128], index: 0, kind: input, shape index: {}]
  %s1 = inlined_call_operand.vmem [shape: f32[8,3,128], index: 1, kind: output, shape index: {}]
  %s2 = sld [smem:[#allocation0]]
  $region41: #{tpu_custom_call.1} parent=0
    _
  %s4 = ssub.s32 1, %s2
  %s5 = scalar_select 0, %s4, %s2
  $region1: #{tpu_custom_call.1} parent=0
    #allocation2 [shape = 'u8[65536]{0}', space=vmem, size = 0x10000, scoped, tag = 'input window, operand 0']
    #allocation3 [shape = 's32[2]{0}', space=sflag, size = 0x8, scoped, tag = 'scoped memory for tpu_custom_call.1']
    %6 = vsyncpa [#allocation3], 0
    %s7 = scalar_lea.sflag [#allocation3], 1
    %8 = vsyncpa %s7, 0
    loop: start=0, step=1, limit=4
    $region2: #{tpu_custom_call.1} parent=1 // loop_pre_header
      _
    $region3: #{tpu_custom_call.1} parent=1 // loop_header
      %s10 = sphi 0, %s14
      %p11 = scmp.ge.s32.totalorder %s10, 4
      %s20 = sphi 0, %s22
      %s23 = sphi 0, %s20
      %s24 = sphi 0, %s23
      %s40 = sphi 0, %s24
      %s46 = sphi 0, %s48
      %s49 = sphi 0, %s46
      %s50 = sphi 0, %s49
      %s66 = sphi 0, %s50
    $region4: #{tpu_custom_call.1} parent=1 // loop_header_branch
      %13 = sbr.rel (%p11) target = $region8
    $region5: #{tpu_custom_call.1} parent=1 // loop_body
      %s15 = ssub.s32 %s10, 1
      %s16 = ssub.s32 %s10, 2
      %s17 = sadd.s32 %s10, 1
      %s18 = ssub.s32 %s10, %s17
      %p19 = scmp.eq.s32.totalorder %s18, 0
      %s21 = sadd.s32 %s20, 1
      %s22 = scalar_select %p19, %s20, %s21
      %p25 = pneg %p19
      %p26 = scmp.eq.s32.totalorder %s10, 1
      %p27 = por %p25, %p26
      %p28 = scmp.ne.s32.totalorder %s20, %s23
      %p29 = scmp.eq.s32.totalorder %s10, 0
      %p30 = por %p28, %p29
      %p31 = scmp.ne.s32.totalorder %s20, %s23
      %p32 = scmp.eq.s32.totalorder %s15, 1
      %p33 = por %p31, %p32
      %p34 = scmp.ne.s32.totalorder %s23, %s24
      %p35 = scmp.eq.s32.totalorder %s15, 0
      %p36 = por %p34, %p35
      %p37 = scmp.ne.s32.totalorder %s23, %s24
      %p38 = scmp.eq.s32.totalorder %s16, 1
      %p39 = por %p37, %p38
      %p41 = scmp.ne.s32.totalorder %s24, %s40
      %p42 = scmp.eq.s32.totalorder %s16, 0
      %p43 = por %p41, %p42
      %s44 = ssub.s32 %s10, %s17
      %p45 = scmp.eq.s32.totalorder %s44, 0
      %s47 = sadd.s32 %s46, 1
      %s48 = scalar_select %p45, %s46, %s47
      %p51 = pneg %p45
      %p52 = scmp.eq.s32.totalorder %s10, 1
      %p53 = por %p51, %p52
      %p54 = scmp.ne.s32.totalorder %s46, %s49
      %p55 = scmp.eq.s32.totalorder %s10, 0
      %p56 = por %p54, %p55
      %p57 = scmp.ne.s32.totalorder %s46, %s49
      %p58 = scmp.eq.s32.totalorder %s15, 1
      %p59 = por %p57, %p58
      %p60 = scmp.ne.s32.totalorder %s49, %s50
      %p61 = scmp.eq.s32.totalorder %s15, 0
      %p62 = por %p60, %p61
      %p63 = scmp.ne.s32.totalorder %s49, %s50
      %p64 = scmp.eq.s32.totalorder %s16, 1
      %p65 = por %p63, %p64
      %p67 = scmp.ne.s32.totalorder %s50, %s66
      %p68 = scmp.eq.s32.totalorder %s16, 0
      %p69 = por %p67, %p68
      %p70 = scmp.le.s32.totalorder 1, %s10
      %p71 = scmp.lt.s32.totalorder %s10, 3
      %p72 = pnand %p70, %p71
      %p73 = pneg %p72
      // Predicated region
      $region9: #{tpu_custom_call.1} parent=5 // pred_check
        _
      $region10: #{tpu_custom_call.1} parent=5 // pred_check_branch
        %75 = sbr.rel (%p72) target = $region12
      $region11: #{tpu_custom_call.1} parent=5 // pred_region
        %s76 = ssub.s32 %s10, 1
      $region12: #{tpu_custom_call.1} parent=5 // pred_fallthru
        _
      %p77 = scmp.lt.s32.totalorder %s10, 2
      // Predicated region
      $region13: #{tpu_custom_call.1} parent=5 // pred_check
        %p78 = pneg %p77
      $region14: #{tpu_custom_call.1} parent=5 // pred_check_branch
        %80 = sbr.rel (%p78) target = $region16
      $region15: #{tpu_custom_call.1} parent=5 // pred_region
        // Predicated region
        $region17: #{tpu_custom_call.1} parent=15 // pred_check
          %p81 = pneg %p30
        $region18: #{tpu_custom_call.1} parent=15 // pred_check_branch
          %83 = sbr.rel (%p81) target = $region20
        $region19: #{tpu_custom_call.1} parent=15 // pred_region
          %s84 = sand.u32 %s20, 1
          %s85 = scalar_lea.sflag [#allocation3], %s84
          %s86 = sand.u32 %s20, 1
          %s87 = smul.addr %s86, 64
          %s88 = scalar_lea.vmem [#allocation2], %s87
          %s89 = smul.u32 4, %s10
          %s91 = ssub.s32 1024, 1024
          %92 = vsyncadd %s85, %s91
          %s93 = smul.addr %s89, 2
          %s94 = smul.addr %s93, 128
          %s95 = scalar_lea.hbm %s0, %s94
          %s96 = sshll.u32 %s88, 4
          %s97 = int_to_ptr.vmem [resolvable:$true] %s96
          %102 = dma.hbm_to_vmem [thread:$0]  %s95, 1024, %s97, %s85, 128, 128, 8
        $region20: #{tpu_custom_call.1} parent=15 // pred_fallthru
          _
      $region16: #{tpu_custom_call.1} parent=5 // pred_fallthru
        _
      %p103 = scmp.le.s32.totalorder 1, %s10
      %p104 = scmp.lt.s32.totalorder %s10, 3
      %p105 = pnand %p103, %p104
      %p106 = pneg %p105
      // Predicated region
      $region21: #{tpu_custom_call.1} parent=5 // pred_check
        _
      $region22: #{tpu_custom_call.1} parent=5 // pred_check_branch
        %108 = sbr.rel (%p105) target = $region24
      $region23: #{tpu_custom_call.1} parent=5 // pred_region
        %s109 = ssub.s32 %s10, 1
        %s110 = sand.u32 %s23, 1
        %s111 = scalar_lea.sflag [#allocation3], %s110
        %s112 = sand.u32 %s23, 1
        %s113 = smul.addr %s112, 64
        %s114 = scalar_lea.vmem [#allocation2], %s113
        // Predicated region
        $region25: #{tpu_custom_call.1} parent=23 // pred_check
          %p115 = pneg %p36
        $region26: #{tpu_custom_call.1} parent=23 // pred_check_branch
          %117 = sbr.rel (%p115) target = $region28
        $region27: #{tpu_custom_call.1} parent=23 // pred_region
          %118 = dma.done %s111, 1024
        $region28: #{tpu_custom_call.1} parent=23 // pred_fallthru
          _
        %s119 = sand.u32 %s23, 1
        %s120 = scalar_lea.sflag [#allocation3], %s119
        %s121 = sand.u32 %s23, 1
        %s122 = smul.addr %s121, 64
        %s123 = scalar_lea.vmem [#allocation2], %s122
        %p124 = pneg %p36
        %p125 = pneg %p33
        %p126 = pneg %p62
        %p127 = pneg %p59
        %s128 = smul.u32 4, %s15
        %p129 = scmp.lt.s32.totalorder %s128, 7
        %s130 = scalar_select %p129, %s128, 7
        %s131 = smul.addr %s130, 4
        %s132 = scalar_lea.vmem %s1, %s131
        %s133 = smul.u32 4, %s15
        %s134 = smul.u32 4, %s15
        %p135 = scmp.lt.s32.totalorder %s134, 7
        %s136 = scalar_select %p135, %s134, 7
        %s137 = smul.addr %s136, 4
        %s138 = scalar_lea.vmem %s1, %s137
        %s139 = smul.u32 4, %s15
        %v140 = vld [vmem:[%s114] sm:$0xff]
        %v141 = vld [vmem:[%s114 + $0x8] sm:$0xff]
        %v142 = vld [vmem:[%s114 + $0x10] sm:$0xff]
        %v143 = vld [vmem:[%s114 + $0x18] sm:$0xff]
        %v144 = vld [vmem:[%s114 + $0x20] sm:$0xff]
        %v145 = vld [vmem:[%s114 + $0x28] sm:$0xff]
        %v146 = vld [vmem:[%s114 + $0x30] sm:$0xff]
        %v147 = vld [vmem:[%s114 + $0x38] sm:$0xff]
        %vm148 = vcmp.ne.f32.partialorder %v140, %v140
        %vm149 = vcmp.ne.f32.partialorder %v141, %v141
        %vm150 = vcmp.ne.f32.partialorder %v142, %v142
        %vm151 = vcmp.ne.f32.partialorder %v143, %v143
        %vm152 = vcmp.ne.f32.partialorder %v144, %v144
        %vm153 = vcmp.ne.f32.partialorder %v145, %v145
        %vm154 = vcmp.ne.f32.partialorder %v146, %v146
        %vm155 = vcmp.ne.f32.partialorder %v147, %v147
        %vm156 = vmxor %vm148, 1
        %vm157 = vmxor %vm149, 1
        %vm158 = vmxor %vm150, 1
        %vm159 = vmxor %vm151, 1
        %vm160 = vmxor %vm152, 1
        %vm161 = vmxor %vm153, 1
        %vm162 = vmxor %vm154, 1
        %vm163 = vmxor %vm155, 1
        %v164 = vsel %vm156, %v140, 0.0
        %v165 = vsel %vm157, %v141, 0.0
        %v166 = vsel %vm158, %v142, 0.0
        %v167 = vsel %vm159, %v143, 0.0
        %v168 = vsel %vm160, %v144, 0.0
        %v169 = vsel %vm161, %v145, 0.0
        %v170 = vsel %vm162, %v146, 0.0
        %v171 = vsel %vm163, %v147, 0.0
        %v172 = vsel %vm156, 1, 0
        %v173 = vsel %vm157, 1, 0
        %v174 = vsel %vm158, 1, 0
        %v175 = vsel %vm159, 1, 0
        %v176 = vsel %vm160, 1, 0
        %v177 = vsel %vm161, 1, 0
        %v178 = vsel %vm162, 1, 0
        %v179 = vsel %vm163, 1, 0
        %v180 = vcvt.s32.f32 %v172
        %v181 = vcvt.s32.f32 %v173
        %v182 = vcvt.s32.f32 %v174
        %v183 = vcvt.s32.f32 %v175
        %v184 = vcvt.s32.f32 %v176
        %v185 = vcvt.s32.f32 %v177
        %v186 = vcvt.s32.f32 %v178
        %v187 = vcvt.s32.f32 %v179
        %vm188 = vcmask 1043456
        %v189 = vsel %vm188, %v164, 0.0
        %v190 = vrot.slane %v189, 4
        %v191 = vadd.f32 %v189, %v190
        %v192 = vrot.slane %v191, 2
        %v193 = vadd.f32 %v191, %v192
        %v194 = vrot.slane %v193, 1
        %v195 = vadd.f32 %v193, %v194
        %v196 = vsel %vm188, %v166, 0.0
        %v197 = vrot.slane %v196, 4
        %v198 = vadd.f32 %v196, %v197
        %v199 = vrot.slane %v198, 2
        %v200 = vadd.f32 %v198, %v199
        %v201 = vrot.slane %v200, 1
        %v202 = vadd.f32 %v200, %v201
        %v203 = vsel %vm188, %v168, 0.0
        %v204 = vrot.slane %v203, 4
        %v205 = vadd.f32 %v203, %v204
        %v206 = vrot.slane %v205, 2
        %v207 = vadd.f32 %v205, %v206
        %v208 = vrot.slane %v207, 1
        %v209 = vadd.f32 %v207, %v208
        %v210 = vsel %vm188, %v170, 0.0
        %v211 = vrot.slane %v210, 4
        %v212 = vadd.f32 %v210, %v211
        %v213 = vrot.slane %v212, 2
        %v214 = vadd.f32 %v212, %v213
        %v215 = vrot.slane %v214, 1
        %v216 = vadd.f32 %v214, %v215
        %v217 = vsel %vm188, %v180, 0.0
        %v218 = vrot.slane %v217, 4
        %v219 = vadd.f32 %v217, %v218
        %v220 = vrot.slane %v219, 2
        %v221 = vadd.f32 %v219, %v220
        %v222 = vrot.slane %v221, 1
        %v223 = vadd.f32 %v221, %v222
        %v224 = vsel %vm188, %v182, 0.0
        %v225 = vrot.slane %v224, 4
        %v226 = vadd.f32 %v224, %v225
        %v227 = vrot.slane %v226, 2
        %v228 = vadd.f32 %v226, %v227
        %v229 = vrot.slane %v228, 1
        %v230 = vadd.f32 %v228, %v229
        %v231 = vsel %vm188, %v184, 0.0
        %v232 = vrot.slane %v231, 4
        %v233 = vadd.f32 %v231, %v232
        %v234 = vrot.slane %v233, 2
        %v235 = vadd.f32 %v233, %v234
        %v236 = vrot.slane %v235, 1
        %v237 = vadd.f32 %v235, %v236
        %v238 = vsel %vm188, %v186, 0.0
        %v239 = vrot.slane %v238, 4
        %v240 = vadd.f32 %v238, %v239
        %v241 = vrot.slane %v240, 2
        %v242 = vadd.f32 %v240, %v241
        %v243 = vrot.slane %v242, 1
        %v244 = vadd.f32 %v242, %v243
        %v245 = vrcp.pop %v223
        %v246 = vmul.f32 %v195, %v245
        %v247 = vrcp.pop %v230
        %v248 = vmul.f32 %v202, %v247
        %v249 = vrcp.pop %v237
        %v250 = vmul.f32 %v209, %v249
        %v251 = vrcp.pop %v244
        %v252 = vmul.f32 %v216, %v251
        %253 = vst [vmem:[%s138] sm:$0x1] %v246
        %254 = vst [vmem:[%s138 + $0x4] sm:$0x1] %v248
        %255 = vst [vmem:[%s138 + $0x8] sm:$0x1] %v250
        %256 = vst [vmem:[%s138 + $0xc] sm:$0x1] %v252
        %v261 = vrot.slane %v164, 4
        %v262 = vrot.slane %v166, 4
        %v263 = vrot.slane %v168, 4
        %v264 = vrot.slane %v170, 4
        %v269 = vsel %vm188, %v261, 0.0
        %v270 = vrot.slane %v269, 4
        %v271 = vadd.f32 %v269, %v270
        %v272 = vrot.slane %v271, 2
        %v273 = vadd.f32 %v271, %v272
        %v274 = vrot.slane %v273, 1
        %v275 = vadd.f32 %v273, %v274
        %v276 = vsel %vm188, %v262, 0.0
        %v277 = vrot.slane %v276, 4
        %v278 = vadd.f32 %v276, %v277
        %v279 = vrot.slane %v278, 2
        %v280 = vadd.f32 %v278, %v279
        %v281 = vrot.slane %v280, 1
        %v282 = vadd.f32 %v280, %v281
        %v283 = vsel %vm188, %v263, 0.0
        %v284 = vrot.slane %v283, 4
        %v285 = vadd.f32 %v283, %v284
        %v286 = vrot.slane %v285, 2
        %v287 = vadd.f32 %v285, %v286
        %v288 = vrot.slane %v287, 1
        %v289 = vadd.f32 %v287, %v288
        %v290 = vsel %vm188, %v264, 0.0
        %v291 = vrot.slane %v290, 4
        %v292 = vadd.f32 %v290, %v291
        %v293 = vrot.slane %v292, 2
        %v294 = vadd.f32 %v292, %v293
        %v295 = vrot.slane %v294, 1
        %v296 = vadd.f32 %v294, %v295
        %v301 = vrot.slane %v180, 4
        %v302 = vrot.slane %v182, 4
        %v303 = vrot.slane %v184, 4
        %v304 = vrot.slane %v186, 4
        %v309 = vsel %vm188, %v301, 0.0
        %v310 = vrot.slane %v309, 4
        %v311 = vadd.f32 %v309, %v310
        %v312 = vrot.slane %v311, 2
        %v313 = vadd.f32 %v311, %v312
        %v314 = vrot.slane %v313, 1
        %v315 = vadd.f32 %v313, %v314
        %v316 = vsel %vm188, %v302, 0.0
        %v317 = vrot.slane %v316, 4
        %v318 = vadd.f32 %v316, %v317
        %v319 = vrot.slane %v318, 2
        %v320 = vadd.f32 %v318, %v319
        %v321 = vrot.slane %v320, 1
        %v322 = vadd.f32 %v320, %v321
        %v323 = vsel %vm188, %v303, 0.0
        %v324 = vrot.slane %v323, 4
        %v325 = vadd.f32 %v323, %v324
        %v326 = vrot.slane %v325, 2
        %v327 = vadd.f32 %v325, %v326
        %v328 = vrot.slane %v327, 1
        %v329 = vadd.f32 %v327, %v328
        %v330 = vsel %vm188, %v304, 0.0
        %v331 = vrot.slane %v330, 4
        %v332 = vadd.f32 %v330, %v331
        %v333 = vrot.slane %v332, 2
        %v334 = vadd.f32 %v332, %v333
        %v335 = vrot.slane %v334, 1
        %v336 = vadd.f32 %v334, %v335
        %v337 = vrcp.pop %v315
        %v338 = vmul.f32 %v275, %v337
        %v339 = vrcp.pop %v322
        %v340 = vmul.f32 %v282, %v339
        %v341 = vrcp.pop %v329
        %v342 = vmul.f32 %v289, %v341
        %v343 = vrcp.pop %v336
        %v344 = vmul.f32 %v296, %v343
        %345 = vst [vmem:[%s138 + $0x1] sm:$0x1] %v338
        %346 = vst [vmem:[%s138 + $0x5] sm:$0x1] %v340
        %347 = vst [vmem:[%s138 + $0x9] sm:$0x1] %v342
        %348 = vst [vmem:[%s138 + $0xd] sm:$0x1] %v344
        %vm349 = vcmask 1046528
        %v350 = vsel %vm349, %v165, 0.0
        %v351 = vrot.slane %v350, 4
        %v352 = vadd.f32 %v350, %v351
        %v353 = vrot.slane %v352, 2
        %v354 = vadd.f32 %v352, %v353
        %v355 = vrot.slane %v354, 1
        %v356 = vadd.f32 %v354, %v355
        %v357 = vsel %vm349, %v167, 0.0
        %v358 = vrot.slane %v357, 4
        %v359 = vadd.f32 %v357, %v358
        %v360 = vrot.slane %v359, 2
        %v361 = vadd.f32 %v359, %v360
        %v362 = vrot.slane %v361, 1
        %v363 = vadd.f32 %v361, %v362
        %v364 = vsel %vm349, %v169, 0.0
        %v365 = vrot.slane %v364, 4
        %v366 = vadd.f32 %v364, %v365
        %v367 = vrot.slane %v366, 2
        %v368 = vadd.f32 %v366, %v367
        %v369 = vrot.slane %v368, 1
        %v370 = vadd.f32 %v368, %v369
        %v371 = vsel %vm349, %v171, 0.0
        %v372 = vrot.slane %v371, 4
        %v373 = vadd.f32 %v371, %v372
        %v374 = vrot.slane %v373, 2
        %v375 = vadd.f32 %v373, %v374
        %v376 = vrot.slane %v375, 1
        %v377 = vadd.f32 %v375, %v376
        %v378 = vsel %vm349, %v181, 0.0
        %v379 = vrot.slane %v378, 4
        %v380 = vadd.f32 %v378, %v379
        %v381 = vrot.slane %v380, 2
        %v382 = vadd.f32 %v380, %v381
        %v383 = vrot.slane %v382, 1
        %v384 = vadd.f32 %v382, %v383
        %v385 = vsel %vm349, %v183, 0.0
        %v386 = vrot.slane %v385, 4
        %v387 = vadd.f32 %v385, %v386
        %v388 = vrot.slane %v387, 2
        %v389 = vadd.f32 %v387, %v388
        %v390 = vrot.slane %v389, 1
        %v391 = vadd.f32 %v389, %v390
        %v392 = vsel %vm349, %v185, 0.0
        %v393 = vrot.slane %v392, 4
        %v394 = vadd.f32 %v392, %v393
        %v395 = vrot.slane %v394, 2
        %v396 = vadd.f32 %v394, %v395
        %v397 = vrot.slane %v396, 1
        %v398 = vadd.f32 %v396, %v397
        %v399 = vsel %vm349, %v187, 0.0
        %v400 = vrot.slane %v399, 4
        %v401 = vadd.f32 %v399, %v400
        %v402 = vrot.slane %v401, 2
        %v403 = vadd.f32 %v401, %v402
        %v404 = vrot.slane %v403, 1
        %v405 = vadd.f32 %v403, %v404
        %v406 = vrcp.pop %v384
        %v407 = vmul.f32 %v356, %v406
        %v408 = vrcp.pop %v391
        %v409 = vmul.f32 %v363, %v408
        %v410 = vrcp.pop %v398
        %v411 = vmul.f32 %v370, %v410
        %v412 = vrcp.pop %v405
        %v413 = vmul.f32 %v377, %v412
        %414 = vst [vmem:[%s138 + $0x2] sm:$0x1] %v407
        %415 = vst [vmem:[%s138 + $0x6] sm:$0x1] %v409
        %416 = vst [vmem:[%s138 + $0xa] sm:$0x1] %v411
        %417 = vst [vmem:[%s138 + $0xe] sm:$0x1] %v413
        %s418 = smul.u32 4, %s15
        %p419 = scmp.lt.s32.totalorder %s418, 7
        %s420 = scalar_select %p419, %s418, 7
        %s421 = smul.addr %s420, 4
        %s422 = scalar_lea.vmem %s1, %s421
        // Predicated region
        $region29: #{tpu_custom_call.1} parent=23 // pred_check
          %p423 = pneg %p59
        $region30: #{tpu_custom_call.1} parent=23 // pred_check_branch
          %425 = sbr.rel (%p423) target = $region32
        $region31: #{tpu_custom_call.1} parent=23 // pred_region
          %s426 = smul.u32 4, %s15
        $region32: #{tpu_custom_call.1} parent=23 // pred_fallthru
          _
      $region24: #{tpu_custom_call.1} parent=5 // pred_fallthru
        _
      %p427 = scmp.le.s32.totalorder 2, %s10
      // Predicated region
      $region33: #{tpu_custom_call.1} parent=5 // pred_check
        %p428 = pneg %p427
      $region34: #{tpu_custom_call.1} parent=5 // pred_check_branch
        %430 = sbr.rel (%p428) target = $region36
      $region35: #{tpu_custom_call.1} parent=5 // pred_region
        %s431 = ssub.s32 %s10, 2
        // Predicated region
        $region37: #{tpu_custom_call.1} parent=35 // pred_check
          %p432 = pneg %p65
        $region38: #{tpu_custom_call.1} parent=35 // pred_check_branch
          %434 = sbr.rel (%p432) target = $region40
        $region39: #{tpu_custom_call.1} parent=35 // pred_region
          %s435 = smul.u32 4, %s16
          %p436 = scmp.lt.s32.totalorder %s435, 7
          %s437 = scalar_select %p436, %s435, 7
          %s438 = smul.addr %s437, 4
          %s439 = scalar_lea.vmem %s1, %s438
        $region40: #{tpu_custom_call.1} parent=35 // pred_fallthru
          _
      $region36: #{tpu_custom_call.1} parent=5 // pred_fallthru
        _
    $region6: #{tpu_custom_call.1} parent=1 // loop_footer
      %s14 = sadd.s32 1, %s10
    $region7: #{tpu_custom_call.1} parent=1 // loop_footer_branch
      %9 = sbr.rel target = $region3
    $region8: #{tpu_custom_call.1} parent=1 // loop_exit
      _
    %440 = vsyncpa [#allocation3], 1
    %s441 = scalar_lea.sflag [#allocation3], 1
    %442 = vsyncpa %s441, 1

</llo_original>
